<compile_context>
chip_gen: v7x
topology: tpu7x:2x2x1
jax: 0.10.0
libtpu: 0.0.40
codegen_flags: <defaults>
</compile_context>

<pallas_src>
import functools

import jax
import jax.numpy as jnp
import numpy as np
from jax import lax
from jax.experimental import pallas as pl
from jax.experimental.pallas import tpu as pltpu


def _ddf_kernel(*refs, W, D, d_pow2):
    """refs = ([d_pos_ref,] x_ref, o_ref)

    x_ref: (H, W*D)    one displacement component, lane-dense merged W*D axis.
    o_ref: (3, H, W*D) rows a=0..2 hold the H / W / D derivatives of that component.
    d_pos_ref (only when D is not a power of two): (1, W*D) int32, index within D.
    """
    if d_pow2:
        x_ref, o_ref = refs
        dpos_ref = None
    else:
        dpos_ref, x_ref, o_ref = refs
    H, WD = x_ref.shape
    c = pl.program_id(1)                       # displacement component of this step

    # D-boundary masks at minimal (1, WD) shape; jnp.where broadcasts over sublanes.
    if d_pow2:
        dpos = lax.broadcasted_iota(jnp.int32, (1, WD), 1) & (D - 1)
    else:
        dpos = dpos_ref[...]
    d_lo = dpos == 0
    d_hi = dpos == D - 1

    x = x_ref[...].astype(jnp.float32)         # f32 math even for bf16 I/O

    def shift(v, axis, n, s):
        # value[i + s] at position i along `axis` (== jnp.roll by -s).
        return pltpu.roll(v, (n - s) % n, axis)

    # Derivative axis a -> (roll axis in (H, W*D) space, extent, step):
    #   a=0: H (sublane, step 1), a=1: W (lane, step D), a=2: D (lane, step 1).
    dirs = ((0, H, 1), (1, WD, D), (1, WD, 1))

    for a, (axis, n, s) in enumerate(dirs):
        # Central difference.  Wrap-around entries from the rolls appear only at
        # positions the boundary fix-ups below overwrite.
        d = 0.5 * (shift(x, axis, n, s) - shift(x, axis, n, -s))

        # D-axis replicate clamp (period-D lane pattern): d==0 <- d==1, d==D-1 <- d==D-2.
        d = jnp.where(d_lo, shift(d, 1, WD, 1),
                      jnp.where(d_hi, shift(d, 1, WD, -1), d))

        # Jacobian bias: +1 on the diagonal (output channel 3*c + c).
        d = d + (c == a).astype(jnp.float32)
        o_ref[a] = d.astype(o_ref.dtype)

        # W-axis replicate clamp: copy the (already D-clamped) w==1 / w==W-2 lane
        # groups onto the w==0 / w==W-1 boundary groups.  Thin strip copies, no
        # full-tile roll/select.
        o_ref[a, :, pl.ds(0, D)] = o_ref[a, :, pl.ds(D, D)]
        o_ref[a, :, pl.ds((W - 1) * D, D)] = o_ref[a, :, pl.ds((W - 2) * D, D)]

        # H-axis replicate clamp: row 0 <- row 1, row H-1 <- row H-2.  Reads the
        # plane after the W/D fix-ups, so corners compose exactly like the reference.
        o_ref[a, pl.ds(0, 1), :] = o_ref[a, pl.ds(1, 1), :]
        o_ref[a, pl.ds(H - 1, 1), :] = o_ref[a, pl.ds(H - 2, 1), :]


def derivative_of_ddf(x):
    """x: (B, 3, H, W, D) float -> (B, 9, H, W, D) Jacobian matrix field."""
    B, C, H, W, D = x.shape
    assert C == 3, "expected Bx3xHxWxD input"
    assert H >= 3 and W >= 3 and D >= 3, "central difference needs >=3 voxels per dim"
    WD = W * D
    d_pow2 = (D & (D - 1)) == 0

    # Lane-dense layout: merge W and D into the last (lane) axis; free on the host.
    x2 = x.reshape(B, 3, WD * 0 + H, WD) if False else x.reshape(B, 3, H, WD)

    itemsize = jnp.dtype(x.dtype).itemsize
    plane = H * WD * itemsize

    # Generation-aware VMEM budget: double-buffered (1 in + 3 out) planes plus
    # temporaries, capped near the real scoped ceiling of this chip generation
    # (v5e/v6e: 128 MiB, v7x: 64 MiB) instead of a blanket 64 MiB cap.
    try:
        cap = int(getattr(pltpu.get_tpu_info(), "vmem_capacity_bytes", 0)) or (64 << 20)
    except Exception:
        cap = 64 << 20
    ceiling = max(min(cap - (16 << 20), int(cap * 0.8)), 32 << 20)
    need = 2 * (1 + 3) * plane + 6 * plane + (4 << 20)
    vmem_limit = int(min(max(need, 32 << 20), ceiling))

    cost = pl.CostEstimate(
        flops=6 * 9 * B * H * WD,
        transcendentals=0,
        bytes_accessed=(3 + 9) * B * H * WD * itemsize,
    )

    kernel = functools.partial(_ddf_kernel, W=W, D=D, d_pow2=d_pow2)

    in_specs = [pl.BlockSpec((None, None, H, WD), lambda b, c: (b, c, 0, 0))]
    args = [x2]
    if not d_pow2:
        # Index-within-D of every merged lane column (avoids vector int mod in-kernel).
        d_pos = jnp.tile(jnp.arange(D, dtype=jnp.int32), W).reshape(1, WD)
        in_specs = [pl.BlockSpec((1, WD), lambda b, c: (0, 0))] + in_specs
        args = [d_pos] + args

    out = pl.pallas_call(
        kernel,
        out_shape=jax.ShapeDtypeStruct((B, 9, H, WD), x.dtype),
        grid=(B, 3),
        in_specs=in_specs,
        out_specs=pl.BlockSpec((None, 3, H, WD), lambda b, c: (b, c, 0, 0)),
        compiler_params=pltpu.CompilerParams(
            dimension_semantics=("parallel", "parallel"),
            vmem_limit_bytes=vmem_limit,
        ),
        cost_estimate=cost,
    )(*args)

    # TODO(synk): for very large volumes on v7x (64 MiB VMEM, e.g. >=128^3 f32) add an
    # H-tiling grid axis with a +/-1-row halo (overlapping pl.Element blocks or manual
    # make_async_copy); the (B,3) grid split already keeps typical DDF sizes on the
    # full-plane fast path.
    return out.reshape(B, 9, H, W, D)


def _reference(x):
    """Pure-JAX reference mirroring the PyTorch forward pass."""
    B, C, H, W, D = x.shape
    dh = 0.5 * (x[:, :, 2:, 1:-1, 1:-1] - x[:, :, :-2, 1:-1, 1:-1])
    dw = 0.5 * (x[:, :, 1:-1, 2:, 1:-1] - x[:, :, 1:-1, :-2, 1:-1])
    dd = 0.5 * (x[:, :, 1:-1, 1:-1, 2:] - x[:, :, 1:-1, 1:-1, :-2])
    deriv = jnp.stack([dh, dw, dd], axis=2).reshape(B, 9, H - 2, W - 2, D - 2)
    deriv = jnp.pad(deriv, ((0, 0), (0, 0), (1, 1), (1, 1), (1, 1)), mode="edge")
    bias = jnp.eye(3, dtype=x.dtype).reshape(1, 9, 1, 1, 1)
    return deriv + bias


if __name__ == "__main__":
    key0, key1 = jax.random.split(jax.random.PRNGKey(0))

    # Main config (power-of-two D: no d_pos input stream).
    x = jax.random.normal(key0, (2, 3, 16, 16, 16), dtype=jnp.float32)
    out = jax.block_until_ready(derivative_of_ddf(x))
    ref = jax.block_until_ready(_reference(x))
    np.testing.assert_allclose(np.asarray(out), np.asarray(ref), rtol=1e-5, atol=1e-5)

    # Non-power-of-two D exercises the d_pos mask-input path.
    x2 = jax.random.normal(key1, (1, 3, 8, 16, 24), dtype=jnp.float32)
    out2 = jax.block_until_ready(derivative_of_ddf(x2))
    ref2 = jax.block_until_ready(_reference(x2))
    np.testing.assert_allclose(np.asarray(out2), np.asarray(ref2), rtol=1e-5, atol=1e-5)

    print("KERNEL_OK")
</pallas_src>

<mosaic_0001>
module attributes {stable_mosaic.version = 11 : i64} {
  func.func @_ddf_kernel(%arg0: i32, %arg1: i32, %arg2: memref<1x1x16x256xf32, #tpu.memory_space<vmem>>, %arg3: memref<1x3x16x256xf32, #tpu.memory_space<vmem>>) attributes {dimension_semantics = [#tpu.dimension_semantics<parallel>, #tpu.dimension_semantics<parallel>], iteration_bounds = array<i64: 2, 3>, scalar_prefetch = 0 : i64, scratch_operands = 0 : i64, tpu.core_type = #tpu.core_type<tc>, window_params = [{transform_indices = @transform_0, window_bounds = array<i64: 1, 1, 16, 256>}, {transform_indices = @transform_1, window_bounds = array<i64: 1, 3, 16, 256>}]} {
    %0 = tpu.iota {dimensions = array<i32: 1>} : vector<1x256xi32>
    %c15_i32 = arith.constant 15 : i32
    %1 = vector.broadcast %c15_i32 : i32 to vector<1x256xi32>
    %2 = arith.andi %0, %1 : vector<1x256xi32>
    %c0_i32 = arith.constant 0 : i32
    %3 = vector.broadcast %c0_i32 : i32 to vector<1x256xi32>
    %4 = arith.cmpi eq, %2, %3 : vector<1x256xi32>
    %c15_i32_0 = arith.constant 15 : i32
    %5 = vector.broadcast %c15_i32_0 : i32 to vector<1x256xi32>
    %6 = arith.cmpi eq, %2, %5 : vector<1x256xi32>
    %c0 = arith.constant 0 : index
    %c0_1 = arith.constant 0 : index
    %c0_2 = arith.constant 0 : index
    %c0_3 = arith.constant 0 : index
    %7 = vector.load %arg2[%c0, %c0_1, %c0_2, %c0_3] : memref<1x1x16x256xf32, #tpu.memory_space<vmem>>, vector<1x1x16x256xf32>
    %8 = vector.shape_cast %7 : vector<1x1x16x256xf32> to vector<16x256xf32>
    %c15_i32_4 = arith.constant 15 : i32
    %9 = tpu.dynamic_rotate %8 by %c15_i32_4 dim 0 : vector<16x256xf32>, i32 -> vector<16x256xf32>
    %c1_i32 = arith.constant 1 : i32
    %10 = tpu.dynamic_rotate %8 by %c1_i32 dim 0 : vector<16x256xf32>, i32 -> vector<16x256xf32>
    %11 = arith.subf %9, %10 : vector<16x256xf32>
    %cst = arith.constant 5.000000e-01 : f32
    %12 = vector.broadcast %cst : f32 to vector<16x256xf32>
    %13 = arith.mulf %12, %11 : vector<16x256xf32>
    %c255_i32 = arith.constant 255 : i32
    %14 = tpu.dynamic_rotate %13 by %c255_i32 dim 1 : vector<16x256xf32>, i32 -> vector<16x256xf32>
    %c1_i32_5 = arith.constant 1 : i32
    %15 = tpu.dynamic_rotate %13 by %c1_i32_5 dim 1 : vector<16x256xf32>, i32 -> vector<16x256xf32>
    %16 = vector.shape_cast %6 : vector<1x256xi1> to vector<1x256xi1>
    %17 = vector.broadcast %16 : vector<1x256xi1> to vector<16x256xi1>
    %18 = arith.select %17, %15, %13 : vector<16x256xi1>, vector<16x256xf32>
    %19 = vector.shape_cast %4 : vector<1x256xi1> to vector<1x256xi1>
    %20 = vector.broadcast %19 : vector<1x256xi1> to vector<16x256xi1>
    %21 = arith.select %20, %14, %18 : vector<16x256xi1>, vector<16x256xf32>
    %c0_i32_6 = arith.constant 0 : i32
    %22 = arith.cmpi eq, %arg1, %c0_i32_6 : i32
    %23 = arith.extui %22 : i1 to i32
    %24 = arith.sitofp %23 : i32 to f32
    %25 = vector.broadcast %24 : f32 to vector<16x256xf32>
    %26 = arith.addf %21, %25 : vector<16x256xf32>
    %c0_7 = arith.constant 0 : index
    %c0_8 = arith.constant 0 : index
    %c0_9 = arith.constant 0 : index
    %c0_10 = arith.constant 0 : index
    %27 = vector.load %arg3[%c0_7, %c0_8, %c0_9, %c0_10] : memref<1x3x16x256xf32, #tpu.memory_space<vmem>>, vector<1x1x16x256xf32>
    %28 = vector.shape_cast %27 : vector<1x1x16x256xf32> to vector<16x256xf32>
    %29 = vector.shape_cast %26 : vector<16x256xf32> to vector<1x1x16x256xf32>
    tpu.vector_store %arg3[%c0_7, %c0_8, %c0_9, %c0_10], %29 {strides = array<i32>} : memref<1x3x16x256xf32, #tpu.memory_space<vmem>>, vector<1x1x16x256xf32>,
    %c0_11 = arith.constant 0 : index
    %c0_12 = arith.constant 0 : index
    %c0_13 = arith.constant 0 : index
    %c16 = arith.constant 16 : index
    %30 = vector.load %arg3[%c0_11, %c0_12, %c0_13, %c16] : memref<1x3x16x256xf32, #tpu.memory_space<vmem>>, vector<1x1x16x16xf32>
    %31 = vector.shape_cast %30 : vector<1x1x16x16xf32> to vector<16x16xf32>
    %c0_14 = arith.constant 0 : index
    %c0_15 = arith.constant 0 : index
    %c0_16 = arith.constant 0 : index
    %c0_17 = arith.constant 0 : index
    %32 = vector.load %arg3[%c0_14, %c0_15, %c0_16, %c0_17] : memref<1x3x16x256xf32, #tpu.memory_space<vmem>>, vector<1x1x16x16xf32>
    %33 = vector.shape_cast %32 : vector<1x1x16x16xf32> to vector<16x16xf32>
    %34 = vector.shape_cast %31 : vector<16x16xf32> to vector<1x1x16x16xf32>
    tpu.vector_store %arg3[%c0_14, %c0_15, %c0_16, %c0_17], %34 {strides = array<i32>} : memref<1x3x16x256xf32, #tpu.memory_space<vmem>>, vector<1x1x16x16xf32>,
    %c0_18 = arith.constant 0 : index
    %c0_19 = arith.constant 0 : index
    %c0_20 = arith.constant 0 : index
    %c224 = arith.constant 224 : index
    %35 = vector.load %arg3[%c0_18, %c0_19, %c0_20, %c224] : memref<1x3x16x256xf32, #tpu.memory_space<vmem>>, vector<1x1x16x16xf32>
    %36 = vector.shape_cast %35 : vector<1x1x16x16xf32> to vector<16x16xf32>
    %c0_21 = arith.constant 0 : index
    %c0_22 = arith.constant 0 : index
    %c0_23 = arith.constant 0 : index
    %c240 = arith.constant 240 : index
    %37 = vector.load %arg3[%c0_21, %c0_22, %c0_23, %c240] : memref<1x3x16x256xf32, #tpu.memory_space<vmem>>, vector<1x1x16x16xf32>
    %38 = vector.shape_cast %37 : vector<1x1x16x16xf32> to vector<16x16xf32>
    %39 = vector.shape_cast %36 : vector<16x16xf32> to vector<1x1x16x16xf32>
    tpu.vector_store %arg3[%c0_21, %c0_22, %c0_23, %c240], %39 {strides = array<i32>} : memref<1x3x16x256xf32, #tpu.memory_space<vmem>>, vector<1x1x16x16xf32>,
    %c0_24 = arith.constant 0 : index
    %c0_25 = arith.constant 0 : index
    %c1 = arith.constant 1 : index
    %c0_26 = arith.constant 0 : index
    %40 = vector.load %arg3[%c0_24, %c0_25, %c1, %c0_26] : memref<1x3x16x256xf32, #tpu.memory_space<vmem>>, vector<1x1x1x256xf32>
    %41 = vector.shape_cast %40 : vector<1x1x1x256xf32> to vector<1x256xf32>
    %c0_27 = arith.constant 0 : index
    %c0_28 = arith.constant 0 : index
    %c0_29 = arith.constant 0 : index
    %c0_30 = arith.constant 0 : index
    %42 = vector.load %arg3[%c0_27, %c0_28, %c0_29, %c0_30] : memref<1x3x16x256xf32, #tpu.memory_space<vmem>>, vector<1x1x1x256xf32>
    %43 = vector.shape_cast %42 : vector<1x1x1x256xf32> to vector<1x256xf32>
    %44 = vector.shape_cast %41 : vector<1x256xf32> to vector<1x1x1x256xf32>
    tpu.vector_store %arg3[%c0_27, %c0_28, %c0_29, %c0_30], %44 {strides = array<i32>} : memref<1x3x16x256xf32, #tpu.memory_space<vmem>>, vector<1x1x1x256xf32>,
    %c0_31 = arith.constant 0 : index
    %c0_32 = arith.constant 0 : index
    %c14 = arith.constant 14 : index
    %c0_33 = arith.constant 0 : index
    %45 = vector.load %arg3[%c0_31, %c0_32, %c14, %c0_33] : memref<1x3x16x256xf32, #tpu.memory_space<vmem>>, vector<1x1x1x256xf32>
    %46 = vector.shape_cast %45 : vector<1x1x1x256xf32> to vector<1x256xf32>
    %c0_34 = arith.constant 0 : index
    %c0_35 = arith.constant 0 : index
    %c15 = arith.constant 15 : index
    %c0_36 = arith.constant 0 : index
    %47 = vector.load %arg3[%c0_34, %c0_35, %c15, %c0_36] : memref<1x3x16x256xf32, #tpu.memory_space<vmem>>, vector<1x1x1x256xf32>
    %48 = vector.shape_cast %47 : vector<1x1x1x256xf32> to vector<1x256xf32>
    %49 = vector.shape_cast %46 : vector<1x256xf32> to vector<1x1x1x256xf32>
    tpu.vector_store %arg3[%c0_34, %c0_35, %c15, %c0_36], %49 {strides = array<i32>} : memref<1x3x16x256xf32, #tpu.memory_space<vmem>>, vector<1x1x1x256xf32>,
    %c240_i32 = arith.constant 240 : i32
    %50 = tpu.dynamic_rotate %8 by %c240_i32 dim 1 : vector<16x256xf32>, i32 -> vector<16x256xf32>
    %c16_i32 = arith.constant 16 : i32
    %51 = tpu.dynamic_rotate %8 by %c16_i32 dim 1 : vector<16x256xf32>, i32 -> vector<16x256xf32>
    %52 = arith.subf %50, %51 : vector<16x256xf32>
    %cst_37 = arith.constant 5.000000e-01 : f32
    %53 = vector.broadcast %cst_37 : f32 to vector<16x256xf32>
    %54 = arith.mulf %53, %52 : vector<16x256xf32>
    %c255_i32_38 = arith.constant 255 : i32
    %55 = tpu.dynamic_rotate %54 by %c255_i32_38 dim 1 : vector<16x256xf32>, i32 -> vector<16x256xf32>
    %c1_i32_39 = arith.constant 1 : i32
    %56 = tpu.dynamic_rotate %54 by %c1_i32_39 dim 1 : vector<16x256xf32>, i32 -> vector<16x256xf32>
    %57 = vector.shape_cast %6 : vector<1x256xi1> to vector<1x256xi1>
    %58 = vector.broadcast %57 : vector<1x256xi1> to vector<16x256xi1>
    %59 = arith.select %58, %56, %54 : vector<16x256xi1>, vector<16x256xf32>
    %60 = vector.shape_cast %4 : vector<1x256xi1> to vector<1x256xi1>
    %61 = vector.broadcast %60 : vector<1x256xi1> to vector<16x256xi1>
    %62 = arith.select %61, %55, %59 : vector<16x256xi1>, vector<16x256xf32>
    %c1_i32_40 = arith.constant 1 : i32
    %63 = arith.cmpi eq, %arg1, %c1_i32_40 : i32
    %64 = arith.extui %63 : i1 to i32
    %65 = arith.sitofp %64 : i32 to f32
    %66 = vector.broadcast %65 : f32 to vector<16x256xf32>
    %67 = arith.addf %62, %66 : vector<16x256xf32>
    %c0_41 = arith.constant 0 : index
    %c1_42 = arith.constant 1 : index
    %c0_43 = arith.constant 0 : index
    %c0_44 = arith.constant 0 : index
    %68 = vector.load %arg3[%c0_41, %c1_42, %c0_43, %c0_44] : memref<1x3x16x256xf32, #tpu.memory_space<vmem>>, vector<1x1x16x256xf32>
    %69 = vector.shape_cast %68 : vector<1x1x16x256xf32> to vector<16x256xf32>
    %70 = vector.shape_cast %67 : vector<16x256xf32> to vector<1x1x16x256xf32>
    tpu.vector_store %arg3[%c0_41, %c1_42, %c0_43, %c0_44], %70 {strides = array<i32>} : memref<1x3x16x256xf32, #tpu.memory_space<vmem>>, vector<1x1x16x256xf32>,
    %c0_45 = arith.constant 0 : index
    %c1_46 = arith.constant 1 : index
    %c0_47 = arith.constant 0 : index
    %c16_48 = arith.constant 16 : index
    %71 = vector.load %arg3[%c0_45, %c1_46, %c0_47, %c16_48] : memref<1x3x16x256xf32, #tpu.memory_space<vmem>>, vector<1x1x16x16xf32>
    %72 = vector.shape_cast %71 : vector<1x1x16x16xf32> to vector<16x16xf32>
    %c0_49 = arith.constant 0 : index
    %c1_50 = arith.constant 1 : index
    %c0_51 = arith.constant 0 : index
    %c0_52 = arith.constant 0 : index
    %73 = vector.load %arg3[%c0_49, %c1_50, %c0_51, %c0_52] : memref<1x3x16x256xf32, #tpu.memory_space<vmem>>, vector<1x1x16x16xf32>
    %74 = vector.shape_cast %73 : vector<1x1x16x16xf32> to vector<16x16xf32>
    %75 = vector.shape_cast %72 : vector<16x16xf32> to vector<1x1x16x16xf32>
    tpu.vector_store %arg3[%c0_49, %c1_50, %c0_51, %c0_52], %75 {strides = array<i32>} : memref<1x3x16x256xf32, #tpu.memory_space<vmem>>, vector<1x1x16x16xf32>,
    %c0_53 = arith.constant 0 : index
    %c1_54 = arith.constant 1 : index
    %c0_55 = arith.constant 0 : index
    %c224_56 = arith.constant 224 : index
    %76 = vector.load %arg3[%c0_53, %c1_54, %c0_55, %c224_56] : memref<1x3x16x256xf32, #tpu.memory_space<vmem>>, vector<1x1x16x16xf32>
    %77 = vector.shape_cast %76 : vector<1x1x16x16xf32> to vector<16x16xf32>
    %c0_57 = arith.constant 0 : index
    %c1_58 = arith.constant 1 : index
    %c0_59 = arith.constant 0 : index
    %c240_60 = arith.constant 240 : index
    %78 = vector.load %arg3[%c0_57, %c1_58, %c0_59, %c240_60] : memref<1x3x16x256xf32, #tpu.memory_space<vmem>>, vector<1x1x16x16xf32>
    %79 = vector.shape_cast %78 : vector<1x1x16x16xf32> to vector<16x16xf32>
    %80 = vector.shape_cast %77 : vector<16x16xf32> to vector<1x1x16x16xf32>
    tpu.vector_store %arg3[%c0_57, %c1_58, %c0_59, %c240_60], %80 {strides = array<i32>} : memref<1x3x16x256xf32, #tpu.memory_space<vmem>>, vector<1x1x16x16xf32>,
    %c0_61 = arith.constant 0 : index
    %c1_62 = arith.constant 1 : index
    %c1_63 = arith.constant 1 : index
    %c0_64 = arith.constant 0 : index
    %81 = vector.load %arg3[%c0_61, %c1_62, %c1_63, %c0_64] : memref<1x3x16x256xf32, #tpu.memory_space<vmem>>, vector<1x1x1x256xf32>
    %82 = vector.shape_cast %81 : vector<1x1x1x256xf32> to vector<1x256xf32>
    %c0_65 = arith.constant 0 : index
    %c1_66 = arith.constant 1 : index
    %c0_67 = arith.constant 0 : index
    %c0_68 = arith.constant 0 : index
    %83 = vector.load %arg3[%c0_65, %c1_66, %c0_67, %c0_68] : memref<1x3x16x256xf32, #tpu.memory_space<vmem>>, vector<1x1x1x256xf32>
    %84 = vector.shape_cast %83 : vector<1x1x1x256xf32> to vector<1x256xf32>
    %85 = vector.shape_cast %82 : vector<1x256xf32> to vector<1x1x1x256xf32>
    tpu.vector_store %arg3[%c0_65, %c1_66, %c0_67, %c0_68], %85 {strides = array<i32>} : memref<1x3x16x256xf32, #tpu.memory_space<vmem>>, vector<1x1x1x256xf32>,
    %c0_69 = arith.constant 0 : index
    %c1_70 = arith.constant 1 : index
    %c14_71 = arith.constant 14 : index
    %c0_72 = arith.constant 0 : index
    %86 = vector.load %arg3[%c0_69, %c1_70, %c14_71, %c0_72] : memref<1x3x16x256xf32, #tpu.memory_space<vmem>>, vector<1x1x1x256xf32>
    %87 = vector.shape_cast %86 : vector<1x1x1x256xf32> to vector<1x256xf32>
    %c0_73 = arith.constant 0 : index
    %c1_74 = arith.constant 1 : index
    %c15_75 = arith.constant 15 : index
    %c0_76 = arith.constant 0 : index
    %88 = vector.load %arg3[%c0_73, %c1_74, %c15_75, %c0_76] : memref<1x3x16x256xf32, #tpu.memory_space<vmem>>, vector<1x1x1x256xf32>
    %89 = vector.shape_cast %88 : vector<1x1x1x256xf32> to vector<1x256xf32>
    %90 = vector.shape_cast %87 : vector<1x256xf32> to vector<1x1x1x256xf32>
    tpu.vector_store %arg3[%c0_73, %c1_74, %c15_75, %c0_76], %90 {strides = array<i32>} : memref<1x3x16x256xf32, #tpu.memory_space<vmem>>, vector<1x1x1x256xf32>,
    %c255_i32_77 = arith.constant 255 : i32
    %91 = tpu.dynamic_rotate %8 by %c255_i32_77 dim 1 : vector<16x256xf32>, i32 -> vector<16x256xf32>
    %c1_i32_78 = arith.constant 1 : i32
    %92 = tpu.dynamic_rotate %8 by %c1_i32_78 dim 1 : vector<16x256xf32>, i32 -> vector<16x256xf32>
    %93 = arith.subf %91, %92 : vector<16x256xf32>
    %cst_79 = arith.constant 5.000000e-01 : f32
    %94 = vector.broadcast %cst_79 : f32 to vector<16x256xf32>
    %95 = arith.mulf %94, %93 : vector<16x256xf32>
    %c255_i32_80 = arith.constant 255 : i32
    %96 = tpu.dynamic_rotate %95 by %c255_i32_80 dim 1 : vector<16x256xf32>, i32 -> vector<16x256xf32>
    %c1_i32_81 = arith.constant 1 : i32
    %97 = tpu.dynamic_rotate %95 by %c1_i32_81 dim 1 : vector<16x256xf32>, i32 -> vector<16x256xf32>
    %98 = vector.shape_cast %6 : vector<1x256xi1> to vector<1x256xi1>
    %99 = vector.broadcast %98 : vector<1x256xi1> to vector<16x256xi1>
    %100 = arith.select %99, %97, %95 : vector<16x256xi1>, vector<16x256xf32>
    %101 = vector.shape_cast %4 : vector<1x256xi1> to vector<1x256xi1>
    %102 = vector.broadcast %101 : vector<1x256xi1> to vector<16x256xi1>
    %103 = arith.select %102, %96, %100 : vector<16x256xi1>, vector<16x256xf32>
    %c2_i32 = arith.constant 2 : i32
    %104 = arith.cmpi eq, %arg1, %c2_i32 : i32
    %105 = arith.extui %104 : i1 to i32
    %106 = arith.sitofp %105 : i32 to f32
    %107 = vector.broadcast %106 : f32 to vector<16x256xf32>
    %108 = arith.addf %103, %107 : vector<16x256xf32>
    %c0_82 = arith.constant 0 : index
    %c2 = arith.constant 2 : index
    %c0_83 = arith.constant 0 : index
    %c0_84 = arith.constant 0 : index
    %109 = vector.load %arg3[%c0_82, %c2, %c0_83, %c0_84] : memref<1x3x16x256xf32, #tpu.memory_space<vmem>>, vector<1x1x16x256xf32>
    %110 = vector.shape_cast %109 : vector<1x1x16x256xf32> to vector<16x256xf32>
    %111 = vector.shape_cast %108 : vector<16x256xf32> to vector<1x1x16x256xf32>
    tpu.vector_store %arg3[%c0_82, %c2, %c0_83, %c0_84], %111 {strides = array<i32>} : memref<1x3x16x256xf32, #tpu.memory_space<vmem>>, vector<1x1x16x256xf32>,
    %c0_85 = arith.constant 0 : index
    %c2_86 = arith.constant 2 : index
    %c0_87 = arith.constant 0 : index
    %c16_88 = arith.constant 16 : index
    %112 = vector.load %arg3[%c0_85, %c2_86, %c0_87, %c16_88] : memref<1x3x16x256xf32, #tpu.memory_space<vmem>>, vector<1x1x16x16xf32>
    %113 = vector.shape_cast %112 : vector<1x1x16x16xf32> to vector<16x16xf32>
    %c0_89 = arith.constant 0 : index
    %c2_90 = arith.constant 2 : index
    %c0_91 = arith.constant 0 : index
    %c0_92 = arith.constant 0 : index
    %114 = vector.load %arg3[%c0_89, %c2_90, %c0_91, %c0_92] : memref<1x3x16x256xf32, #tpu.memory_space<vmem>>, vector<1x1x16x16xf32>
    %115 = vector.shape_cast %114 : vector<1x1x16x16xf32> to vector<16x16xf32>
    %116 = vector.shape_cast %113 : vector<16x16xf32> to vector<1x1x16x16xf32>
    tpu.vector_store %arg3[%c0_89, %c2_90, %c0_91, %c0_92], %116 {strides = array<i32>} : memref<1x3x16x256xf32, #tpu.memory_space<vmem>>, vector<1x1x16x16xf32>,
    %c0_93 = arith.constant 0 : index
    %c2_94 = arith.constant 2 : index
    %c0_95 = arith.constant 0 : index
    %c224_96 = arith.constant 224 : index
    %117 = vector.load %arg3[%c0_93, %c2_94, %c0_95, %c224_96] : memref<1x3x16x256xf32, #tpu.memory_space<vmem>>, vector<1x1x16x16xf32>
    %118 = vector.shape_cast %117 : vector<1x1x16x16xf32> to vector<16x16xf32>
    %c0_97 = arith.constant 0 : index
    %c2_98 = arith.constant 2 : index
    %c0_99 = arith.constant 0 : index
    %c240_100 = arith.constant 240 : index
    %119 = vector.load %arg3[%c0_97, %c2_98, %c0_99, %c240_100] : memref<1x3x16x256xf32, #tpu.memory_space<vmem>>, vector<1x1x16x16xf32>
    %120 = vector.shape_cast %119 : vector<1x1x16x16xf32> to vector<16x16xf32>
    %121 = vector.shape_cast %118 : vector<16x16xf32> to vector<1x1x16x16xf32>
    tpu.vector_store %arg3[%c0_97, %c2_98, %c0_99, %c240_100], %121 {strides = array<i32>} : memref<1x3x16x256xf32, #tpu.memory_space<vmem>>, vector<1x1x16x16xf32>,
    %c0_101 = arith.constant 0 : index
    %c2_102 = arith.constant 2 : index
    %c1_103 = arith.constant 1 : index
    %c0_104 = arith.constant 0 : index
    %122 = vector.load %arg3[%c0_101, %c2_102, %c1_103, %c0_104] : memref<1x3x16x256xf32, #tpu.memory_space<vmem>>, vector<1x1x1x256xf32>
    %123 = vector.shape_cast %122 : vector<1x1x1x256xf32> to vector<1x256xf32>
    %c0_105 = arith.constant 0 : index
    %c2_106 = arith.constant 2 : index
    %c0_107 = arith.constant 0 : index
    %c0_108 = arith.constant 0 : index
    %124 = vector.load %arg3[%c0_105, %c2_106, %c0_107, %c0_108] : memref<1x3x16x256xf32, #tpu.memory_space<vmem>>, vector<1x1x1x256xf32>
    %125 = vector.shape_cast %124 : vector<1x1x1x256xf32> to vector<1x256xf32>
    %126 = vector.shape_cast %123 : vector<1x256xf32> to vector<1x1x1x256xf32>
    tpu.vector_store %arg3[%c0_105, %c2_106, %c0_107, %c0_108], %126 {strides = array<i32>} : memref<1x3x16x256xf32, #tpu.memory_space<vmem>>, vector<1x1x1x256xf32>,
    %c0_109 = arith.constant 0 : index
    %c2_110 = arith.constant 2 : index
    %c14_111 = arith.constant 14 : index
    %c0_112 = arith.constant 0 : index
    %127 = vector.load %arg3[%c0_109, %c2_110, %c14_111, %c0_112] : memref<1x3x16x256xf32, #tpu.memory_space<vmem>>, vector<1x1x1x256xf32>
    %128 = vector.shape_cast %127 : vector<1x1x1x256xf32> to vector<1x256xf32>
    %c0_113 = arith.constant 0 : index
    %c2_114 = arith.constant 2 : index
    %c15_115 = arith.constant 15 : index
    %c0_116 = arith.constant 0 : index
    %129 = vector.load %arg3[%c0_113, %c2_114, %c15_115, %c0_116] : memref<1x3x16x256xf32, #tpu.memory_space<vmem>>, vector<1x1x1x256xf32>
    %130 = vector.shape_cast %129 : vector<1x1x1x256xf32> to vector<1x256xf32>
    %131 = vector.shape_cast %128 : vector<1x256xf32> to vector<1x1x1x256xf32>
    tpu.vector_store %arg3[%c0_113, %c2_114, %c15_115, %c0_116], %131 {strides = array<i32>} : memref<1x3x16x256xf32, #tpu.memory_space<vmem>>, vector<1x1x1x256xf32>,
    return
  }
  func.func @transform_0(%arg0: i32, %arg1: i32) -> (i32, i32, i32, i32) {
    %c0_i32 = arith.constant 0 : i32
    %c0_i32_0 = arith.constant 0 : i32
    %c0_i32_1 = arith.constant 0 : i32
    return %arg0, %arg1, %c0_i32, %c0_i32_0 : i32, i32, i32, i32
  }
  func.func @transform_1(%arg0: i32, %arg1: i32) -> (i32, i32, i32, i32) {
    %c0_i32 = arith.constant 0 : i32
    %c0_i32_0 = arith.constant 0 : i32
    %c0_i32_1 = arith.constant 0 : i32
    return %arg0, %arg1, %c0_i32, %c0_i32_0 : i32, i32, i32, i32
  }
}

</mosaic_0001>

<llo_original>
// kernel: tpu_custom_call.1
$region0: #{tpu_custom_call.1}
  #allocation0 [shape = 'u32[]', space=smem, size = 0x4, offset = 0x4, fixed_abs, tag = 'smem constant byte address 0x4 - core index']
  #allocation1 [shape = 'u32[144,128]{1,0:T(1,128)}', space=vmem, size = 0x12000, scoped, tag = 'internal scratch']
  %s0 = inlined_call_operand.hbm [shape: f32[2,3,16,256], index: 0, kind: input, shape index: {}]
  %s1 = inlined_call_operand.hbm [shape: f32[2,9,16,256], index: 1, kind: output, shape index: {}]
  %s2 = sld [smem:[#allocation0]]
  $region41: #{tpu_custom_call.1} parent=0
    _
  %s4 = ssub.s32 1, %s2
  %s5 = scalar_select 0, %s4, %s2
  $region1: #{tpu_custom_call.1} parent=0
    #allocation2 [shape = 'u8[32768]{0}', space=vmem, size = 0x8000, scoped, tag = 'input window, operand 0']
    #allocation3 [shape = 's32[2]{0}', space=sflag, size = 0x8, scoped, tag = 'scoped memory for tpu_custom_call.1']
    #allocation4 [shape = 's32[2]{0}', space=sflag, size = 0x8, scoped, tag = 'scoped memory for tpu_custom_call.1']
    #allocation5 [shape = 'u8[98304]{0}', space=vmem, size = 0x18000, scoped, tag = 'output window, operand 0']
    %6 = vsyncpa [#allocation3], 0
    %s7 = scalar_lea.sflag [#allocation3], 1
    %8 = vsyncpa %s7, 0
    %9 = vsyncpa [#allocation4], 0
    %s10 = scalar_lea.sflag [#allocation4], 1
    %11 = vsyncpa %s10, 0
    loop: start=0, step=1, limit=8
    $region2: #{tpu_custom_call.1} parent=1 // loop_pre_header
      _
    $region3: #{tpu_custom_call.1} parent=1 // loop_header
      %s13 = sphi 0, %s17
      %p14 = scmp.ge.s32.totalorder %s13, 8
      %s20 = sphi 0, %s32
      %s21 = sphi 0, %s28
      %s22 = sphi 0, %s20
      %s23 = sphi 0, %s21
      %s24 = sphi 0, %s22
      %s25 = sphi 0, %s23
      %s37 = sphi 0, %s39
      %s40 = sphi 0, %s37
      %s41 = sphi 0, %s40
      %s57 = sphi 0, %s41
      %s65 = sphi 0, %s67
      %s68 = sphi 0, %s65
      %s69 = sphi 0, %s68
      %s85 = sphi 0, %s69
    $region4: #{tpu_custom_call.1} parent=1 // loop_header_branch
      %16 = sbr.rel (%p14) target = $region8
    $region5: #{tpu_custom_call.1} parent=1 // loop_body
      %s18 = ssub.s32 %s13, 1
      %s19 = ssub.s32 %s13, 2
      %s26 = sadd.s32 1, %s21
      %p27 = scmp.ge.s32.totalorder %s26, 3
      %s28 = scalar_select %p27, 0, %s26
      %s29 = sadd.s32 1, %s20
      %s30 = scalar_select %p27, %s29, %s20
      %p31 = scmp.ge.s32.totalorder %s30, 2
      %s32 = scalar_select %p31, 0, %s30
      %s33 = ssub.s32 %s20, %s32
      %s34 = ssub.s32 %s21, %s28
      %s35 = sor.u32 %s33, %s34
      %p36 = scmp.eq.s32.totalorder %s35, 0
      %s38 = sadd.s32 %s37, 1
      %s39 = scalar_select %p36, %s37, %s38
      %p42 = pneg %p36
      %p43 = scmp.eq.s32.totalorder %s13, 5
      %p44 = por %p42, %p43
      %p45 = scmp.ne.s32.totalorder %s37, %s40
      %p46 = scmp.eq.s32.totalorder %s13, 0
      %p47 = por %p45, %p46
      %p48 = scmp.ne.s32.totalorder %s37, %s40
      %p49 = scmp.eq.s32.totalorder %s18, 5
      %p50 = por %p48, %p49
      %p51 = scmp.ne.s32.totalorder %s40, %s41
      %p52 = scmp.eq.s32.totalorder %s18, 0
      %p53 = por %p51, %p52
      %p54 = scmp.ne.s32.totalorder %s40, %s41
      %p55 = scmp.eq.s32.totalorder %s19, 5
      %p56 = por %p54, %p55
      %p58 = scmp.ne.s32.totalorder %s41, %s57
      %p59 = scmp.eq.s32.totalorder %s19, 0
      %p60 = por %p58, %p59
      %s61 = ssub.s32 %s20, %s32
      %s62 = ssub.s32 %s21, %s28
      %s63 = sor.u32 %s61, %s62
      %p64 = scmp.eq.s32.totalorder %s63, 0
      %s66 = sadd.s32 %s65, 1
      %s67 = scalar_select %p64, %s65, %s66
      %p70 = pneg %p64
      %p71 = scmp.eq.s32.totalorder %s13, 5
      %p72 = por %p70, %p71
      %p73 = scmp.ne.s32.totalorder %s65, %s68
      %p74 = scmp.eq.s32.totalorder %s13, 0
      %p75 = por %p73, %p74
      %p76 = scmp.ne.s32.totalorder %s65, %s68
      %p77 = scmp.eq.s32.totalorder %s18, 5
      %p78 = por %p76, %p77
      %p79 = scmp.ne.s32.totalorder %s68, %s69
      %p80 = scmp.eq.s32.totalorder %s18, 0
      %p81 = por %p79, %p80
      %p82 = scmp.ne.s32.totalorder %s68, %s69
      %p83 = scmp.eq.s32.totalorder %s19, 5
      %p84 = por %p82, %p83
      %p86 = scmp.ne.s32.totalorder %s69, %s85
      %p87 = scmp.eq.s32.totalorder %s19, 0
      %p88 = por %p86, %p87
      %p89 = scmp.le.s32.totalorder 1, %s13
      %p90 = scmp.lt.s32.totalorder %s13, 7
      %p91 = pnand %p89, %p90
      %p92 = pneg %p91
      // Predicated region
      $region9: #{tpu_custom_call.1} parent=5 // pred_check
        _
      $region10: #{tpu_custom_call.1} parent=5 // pred_check_branch
        %94 = sbr.rel (%p91) target = $region12
      $region11: #{tpu_custom_call.1} parent=5 // pred_region
        %s95 = ssub.s32 %s13, 1
      $region12: #{tpu_custom_call.1} parent=5 // pred_fallthru
        _
      %p96 = scmp.lt.s32.totalorder %s13, 6
      // Predicated region
      $region13: #{tpu_custom_call.1} parent=5 // pred_check
        %p97 = pneg %p96
      $region14: #{tpu_custom_call.1} parent=5 // pred_check_branch
        %99 = sbr.rel (%p97) target = $region16
      $region15: #{tpu_custom_call.1} parent=5 // pred_region
        // Predicated region
        $region17: #{tpu_custom_call.1} parent=15 // pred_check
          %p100 = pneg %p47
        $region18: #{tpu_custom_call.1} parent=15 // pred_check_branch
          %102 = sbr.rel (%p100) target = $region20
        $region19: #{tpu_custom_call.1} parent=15 // pred_region
          %s103 = sand.u32 %s37, 1
          %s104 = scalar_lea.sflag [#allocation3], %s103
          %s105 = sand.u32 %s37, 1
          %s106 = smul.addr %s105, 32
          %s107 = scalar_lea.vmem [#allocation2], %s106
          %s109 = ssub.s32 512, 512
          %110 = vsyncadd %s104, %s109
          %s111 = smul.addr %s21, 4
          %s112 = smul.addr %s20, 12
          %s113 = sadd.s32 %s111, %s112
          %s114 = smul.addr %s113, 128
          %s115 = scalar_lea.hbm %s0, %s114
          %s116 = sshll.u32 %s107, 4
          %s117 = int_to_ptr.vmem [resolvable:$true] %s116
          %122 = dma.hbm_to_vmem [thread:$0]  %s115, 512, %s117, %s104, 256, 256, 16
        $region20: #{tpu_custom_call.1} parent=15 // pred_fallthru
          _
      $region16: #{tpu_custom_call.1} parent=5 // pred_fallthru
        _
      %p123 = scmp.le.s32.totalorder 1, %s13
      %p124 = scmp.lt.s32.totalorder %s13, 7
      %p125 = pnand %p123, %p124
      %p126 = pneg %p125
      // Predicated region
      $region21: #{tpu_custom_call.1} parent=5 // pred_check
        _
      $region22: #{tpu_custom_call.1} parent=5 // pred_check_branch
        %128 = sbr.rel (%p125) target = $region24
      $region23: #{tpu_custom_call.1} parent=5 // pred_region
        %s129 = ssub.s32 %s13, 1
        %s130 = sand.u32 %s40, 1
        %s131 = scalar_lea.sflag [#allocation3], %s130
        %s132 = sand.u32 %s40, 1
        %s133 = smul.addr %s132, 32
        %s134 = scalar_lea.vmem [#allocation2], %s133
        // Predicated region
        $region25: #{tpu_custom_call.1} parent=23 // pred_check
          %p135 = pneg %p53
        $region26: #{tpu_custom_call.1} parent=23 // pred_check_branch
          %137 = sbr.rel (%p135) target = $region28
        $region27: #{tpu_custom_call.1} parent=23 // pred_region
          %138 = dma.done %s131, 512
        $region28: #{tpu_custom_call.1} parent=23 // pred_fallthru
          _
        %s139 = sand.u32 %s40, 1
        %s140 = scalar_lea.sflag [#allocation3], %s139
        %s141 = sand.u32 %s40, 1
        %s142 = smul.addr %s141, 32
        %s143 = scalar_lea.vmem [#allocation2], %s142
        %p144 = pneg %p53
        %p145 = pneg %p50
        %p146 = pneg %p81
        %p147 = pneg %p78
        %s148 = sand.u32 %s68, 1
        %s149 = scalar_lea.sflag [#allocation4], %s148
        %s150 = sand.u32 %s68, 1
        %s151 = smul.addr %s150, 96
        %s152 = scalar_lea.vmem [#allocation5], %s151
        %s153 = smul.u32 3, %s23
        %v154 = vlaneseq
        %v155 = vand.u32 %v154, 127
        %v156 = vadd.s32 %v155, 128
        %v157 = vand.u32 %v155, 15
        %v158 = vand.u32 %v156, 15
        %vm159 = vcmp.eq.s32.totalorder %v157, 0
        %vm160 = vcmp.eq.s32.totalorder %v158, 0
        %vm161 = vcmp.eq.s32.totalorder %v157, 15
        %vm162 = vcmp.eq.s32.totalorder %v158, 15
        %v163 = vld [vmem:[%s134] sm:$0xff]
        %v164 = vld [vmem:[%s134 + $0x8] sm:$0xff]
        %v165 = vld [vmem:[%s134 + $0x10] sm:$0xff]
        %v166 = vld [vmem:[%s134 + $0x18] sm:$0xff]
        %v167 = vrot.slane %v163, 1
        %v168 = vrot.slane %v164, 1
        %v169 = vrot.slane %v165, 1
        %v170 = vrot.slane %v166, 1
        %v171 = vlaneseq
        %v172 = vshrl.u32 %v171, 7
        %vm173 = vcmp.lt.s32.totalorder %v172, 7
        %v174 = vsel %vm173, %v167, %v169
        %v175 = vsel %vm173, %v168, %v170
        %v176 = vsel %vm173, %v169, %v167
        %v177 = vsel %vm173, %v170, %v168
        %v178 = vrot.slane %v163, 7
        %v179 = vrot.slane %v164, 7
        %v180 = vrot.slane %v165, 7
        %v181 = vrot.slane %v166, 7
        %vm182 = vcmp.lt.s32.totalorder %v172, 1
        %v183 = vsel %vm182, %v178, %v180
        %v184 = vsel %vm182, %v179, %v181
        %v185 = vsel %vm182, %v180, %v178
        %v186 = vsel %vm182, %v181, %v179
        %v187 = vsub.f32 %v174, %v185
        %v188 = vsub.f32 %v175, %v186
        %v189 = vsub.f32 %v176, %v183
        %v190 = vsub.f32 %v177, %v184
        %v191 = vmul.f32 %v187, 0.5
        %v192 = vmul.f32 %v188, 0.5
        %v193 = vmul.f32 %v189, 0.5
        %v194 = vmul.f32 %v190, 0.5
        %195 = vrot.lane.b32.xlu0 %v191, 127
        %v196 = vpop.permute.xlu0 %195
        %197 = vrot.lane.b32.xlu0 %v193, 127
        %v198 = vpop.permute.xlu0 %197
        %199 = vrot.lane.b32.xlu0 %v192, 127
        %v200 = vpop.permute.xlu0 %199
        %201 = vrot.lane.b32.xlu0 %v194, 127
        %v202 = vpop.permute.xlu0 %201
        %vm203 = vcmp.lt.s32.totalorder %v155, 127
        %v204 = vsel %vm203, %v196, %v200
        %v205 = vsel %vm203, %v198, %v202
        %v206 = vsel %vm203, %v200, %v196
        %v207 = vsel %vm203, %v202, %v198
        %208 = vrot.lane.b32.xlu0 %v191, 1
        %v209 = vpop.permute.xlu0 %208
        %210 = vrot.lane.b32.xlu0 %v193, 1
        %v211 = vpop.permute.xlu0 %210
        %212 = vrot.lane.b32.xlu0 %v192, 1
        %v213 = vpop.permute.xlu0 %212
        %214 = vrot.lane.b32.xlu0 %v194, 1
        %v215 = vpop.permute.xlu0 %214
        %vm216 = vcmp.lt.s32.totalorder %v155, 1
        %v217 = vsel %vm216, %v209, %v213
        %v218 = vsel %vm216, %v211, %v215
        %v219 = vsel %vm216, %v213, %v209
        %v220 = vsel %vm216, %v215, %v211
        %v221 = vsel %vm161, 1, 0
        %v222 = vsel %vm162, 1, 0
        %vm223 = vcmp.eq.s32.totalorder %v221, 1
        %vm224 = vcmp.eq.s32.totalorder %v222, 1
        %v225 = vsel %vm223, %v219, %v191
        %v226 = vsel %vm224, %v217, %v192
        %v227 = vsel %vm223, %v220, %v193
        %v228 = vsel %vm224, %v218, %v194
        %v229 = vsel %vm159, 1, 0
        %v230 = vsel %vm160, 1, 0
        %vm231 = vcmp.eq.s32.totalorder %v229, 1
        %vm232 = vcmp.eq.s32.totalorder %v230, 1
        %v233 = vsel %vm231, %v204, %v225
        %v234 = vsel %vm232, %v206, %v226
        %v235 = vsel %vm231, %v205, %v227
        %v236 = vsel %vm232, %v207, %v228
        %p237 = scmp.eq.s32.totalorder %s23, 0
        %s238 = scalar_select %p237, 1, 0
        %s239 = scvt.s32.f32 %s238
        %v240 = vstv %s239
        %v241 = vadd.f32 %v233, %v240
        %v242 = vadd.f32 %v234, %v240
        %v243 = vadd.f32 %v235, %v240
        %v244 = vadd.f32 %v236, %v240
        %245 = vst [vmem:[%s152] sm:$0xff] %v241
        %246 = vst [vmem:[%s152 + $0x8] sm:$0xff] %v242
        %247 = vst [vmem:[%s152 + $0x10] sm:$0xff] %v243
        %248 = vst [vmem:[%s152 + $0x18] sm:$0xff] %v244
        %v249 = vld [vmem:[%s152] sm:$0xff]
        %v250 = vld [vmem:[%s152 + $0x10] sm:$0xff]
        %253 = vrot.lane.b32.xlu0 %v249, 112
        %v254 = vpop.permute.xlu0 %253
        %255 = vrot.lane.b32.xlu0 %v250, 112
        %v256 = vpop.permute.xlu0 %255
        %vm259 = vcmask 130048
        %260 = vst.msk [vmem:[%s152] sm:$0xff] %vm259, %v254
        %261 = vst.msk [vmem:[%s152 + $0x10] sm:$0xff] %vm259, %v256
        %v262 = vld [vmem:[%s152 + $0x8] sm:$0xff]
        %v263 = vld [vmem:[%s152 + $0x18] sm:$0xff]
        %266 = vrot.lane.b32.xlu0 %v262, 16
        %v267 = vpop.permute.xlu0 %266
        %268 = vrot.lane.b32.xlu0 %v263, 16
        %v269 = vpop.permute.xlu0 %268
        %vm272 = vcmask 1048448
        %273 = vst.msk [vmem:[%s152 + $0x8] sm:$0xff] %vm272, %v267
        %274 = vst.msk [vmem:[%s152 + $0x18] sm:$0xff] %vm272, %v269
        %s275 = scalar_lea.vmem %s152, 1 [#allocation5]
        %v276 = vld [vmem:[%s275] ss:$8 sm:$0x3]
        %v277 = vlaneseq
        %vm278 = vcmp.ge.s32.totalorder %v277, 0
        %vm279 = vcmp.lt.s32.totalorder %v277, 256
        %vm280 = vmand %vm278, %vm279
        %281 = vst.msk [vmem:[%s152] ss:$8 sm:$0x3] %vm280, %v276
        %282 = vst.msk [vmem:[%s152] ss:$8 sm:$0x0] %vm280, %v276
        %s283 = scalar_lea.vmem %s152, 22 [#allocation5]
        %v284 = vld [vmem:[%s283] ss:$8 sm:$0x3]
        %s285 = scalar_lea.vmem %s152, 23 [#allocation5]
        %286 = vst.msk [vmem:[%s285] ss:$8 sm:$0x3] %vm280, %v284
        %287 = vst.msk [vmem:[%s285] ss:$8 sm:$0x0] %vm280, %v284
        %288 = vrot.lane.b32.xlu0 %v163, 112
        %v289 = vpop.permute.xlu0 %288
        %290 = vrot.lane.b32.xlu0 %v165, 112
        %v291 = vpop.permute.xlu0 %290
        %292 = vrot.lane.b32.xlu0 %v164, 112
        %v293 = vpop.permute.xlu0 %292
        %294 = vrot.lane.b32.xlu0 %v166, 112
        %v295 = vpop.permute.xlu0 %294
        %vm296 = vcmp.lt.s32.totalorder %v155, 112
        %v297 = vsel %vm296, %v289, %v293
        %v298 = vsel %vm296, %v291, %v295
        %v299 = vsel %vm296, %v293, %v289
        %v300 = vsel %vm296, %v295, %v291
        %301 = vrot.lane.b32.xlu0 %v163, 16
        %v302 = vpop.permute.xlu0 %301
        %303 = vrot.lane.b32.xlu0 %v165, 16
        %v304 = vpop.permute.xlu0 %303
        %305 = vrot.lane.b32.xlu0 %v164, 16
        %v306 = vpop.permute.xlu0 %305
        %307 = vrot.lane.b32.xlu0 %v166, 16
        %v308 = vpop.permute.xlu0 %307
        %vm309 = vcmp.lt.s32.totalorder %v155, 16
        %v310 = vsel %vm309, %v302, %v306
        %v311 = vsel %vm309, %v304, %v308
        %v312 = vsel %vm309, %v306, %v302
        %v313 = vsel %vm309, %v308, %v304
        %v314 = vsub.f32 %v297, %v312
        %v315 = vsub.f32 %v299, %v310
        %v316 = vsub.f32 %v298, %v313
        %v317 = vsub.f32 %v300, %v311
        %v318 = vmul.f32 %v314, 0.5
        %v319 = vmul.f32 %v315, 0.5
        %v320 = vmul.f32 %v316, 0.5
        %v321 = vmul.f32 %v317, 0.5
        %322 = vrot.lane.b32.xlu0 %v318, 127
        %v323 = vpop.permute.xlu0 %322
        %324 = vrot.lane.b32.xlu0 %v320, 127
        %v325 = vpop.permute.xlu0 %324
        %326 = vrot.lane.b32.xlu0 %v319, 127
        %v327 = vpop.permute.xlu0 %326
        %328 = vrot.lane.b32.xlu0 %v321, 127
        %v329 = vpop.permute.xlu0 %328
        %v330 = vsel %vm203, %v323, %v327
        %v331 = vsel %vm203, %v325, %v329
        %v332 = vsel %vm203, %v327, %v323
        %v333 = vsel %vm203, %v329, %v325
        %334 = vrot.lane.b32.xlu0 %v318, 1
        %v335 = vpop.permute.xlu0 %334
        %336 = vrot.lane.b32.xlu0 %v320, 1
        %v337 = vpop.permute.xlu0 %336
        %338 = vrot.lane.b32.xlu0 %v319, 1
        %v339 = vpop.permute.xlu0 %338
        %340 = vrot.lane.b32.xlu0 %v321, 1
        %v341 = vpop.permute.xlu0 %340
        %v342 = vsel %vm216, %v335, %v339
        %v343 = vsel %vm216, %v337, %v341
        %v344 = vsel %vm216, %v339, %v335
        %v345 = vsel %vm216, %v341, %v337
        %v346 = vsel %vm223, %v344, %v318
        %v347 = vsel %vm224, %v342, %v319
        %v348 = vsel %vm223, %v345, %v320
        %v349 = vsel %vm224, %v343, %v321
        %v350 = vsel %vm231, %v330, %v346
        %v351 = vsel %vm232, %v332, %v347
        %v352 = vsel %vm231, %v331, %v348
        %v353 = vsel %vm232, %v333, %v349
        %p354 = scmp.eq.s32.totalorder %s23, 1
        %s355 = scalar_select %p354, 1, 0
        %s356 = scvt.s32.f32 %s355
        %v357 = vstv %s356
        %v358 = vadd.f32 %v350, %v357
        %v359 = vadd.f32 %v351, %v357
        %v360 = vadd.f32 %v352, %v357
        %v361 = vadd.f32 %v353, %v357
        %s362 = scalar_lea.vmem %s152, 32 [#allocation5]
        %363 = vst [vmem:[%s362] sm:$0xff] %v358
        %364 = vst [vmem:[%s362 + $0x8] sm:$0xff] %v359
        %365 = vst [vmem:[%s362 + $0x10] sm:$0xff] %v360
        %366 = vst [vmem:[%s362 + $0x18] sm:$0xff] %v361
        %v367 = vld [vmem:[%s362] sm:$0xff]
        %v368 = vld [vmem:[%s362 + $0x10] sm:$0xff]
        %371 = vrot.lane.b32.xlu0 %v367, 112
        %v372 = vpop.permute.xlu0 %371
        %373 = vrot.lane.b32.xlu0 %v368, 112
        %v374 = vpop.permute.xlu0 %373
        %377 = vst.msk [vmem:[%s362] sm:$0xff] %vm259, %v372
        %378 = vst.msk [vmem:[%s362 + $0x10] sm:$0xff] %vm259, %v374
        %v379 = vld [vmem:[%s362 + $0x8] sm:$0xff]
        %v380 = vld [vmem:[%s362 + $0x18] sm:$0xff]
        %383 = vrot.lane.b32.xlu0 %v379, 16
        %v384 = vpop.permute.xlu0 %383
        %385 = vrot.lane.b32.xlu0 %v380, 16
        %v386 = vpop.permute.xlu0 %385
        %389 = vst.msk [vmem:[%s362 + $0x8] sm:$0xff] %vm272, %v384
        %390 = vst.msk [vmem:[%s362 + $0x18] sm:$0xff] %vm272, %v386
        %s391 = scalar_lea.vmem %s362, 1 [#allocation5]
        %v392 = vld [vmem:[%s391] ss:$8 sm:$0x3]
        %393 = vst.msk [vmem:[%s362] ss:$8 sm:$0x3] %vm280, %v392
        %394 = vst.msk [vmem:[%s362] ss:$8 sm:$0x0] %vm280, %v392
        %s395 = scalar_lea.vmem %s362, 22 [#allocation5]
        %v396 = vld [vmem:[%s395] ss:$8 sm:$0x3]
        %s397 = scalar_lea.vmem %s362, 23 [#allocation5]
        %398 = vst.msk [vmem:[%s397] ss:$8 sm:$0x3] %vm280, %v396
        %399 = vst.msk [vmem:[%s397] ss:$8 sm:$0x0] %vm280, %v396
        %400 = vrot.lane.b32.xlu0 %v163, 127
        %v401 = vpop.permute.xlu0 %400
        %402 = vrot.lane.b32.xlu0 %v165, 127
        %v403 = vpop.permute.xlu0 %402
        %404 = vrot.lane.b32.xlu0 %v164, 127
        %v405 = vpop.permute.xlu0 %404
        %406 = vrot.lane.b32.xlu0 %v166, 127
        %v407 = vpop.permute.xlu0 %406
        %v408 = vsel %vm203, %v401, %v405
        %v409 = vsel %vm203, %v403, %v407
        %v410 = vsel %vm203, %v405, %v401
        %v411 = vsel %vm203, %v407, %v403
        %412 = vrot.lane.b32.xlu0 %v163, 1
        %v413 = vpop.permute.xlu0 %412
        %414 = vrot.lane.b32.xlu0 %v165, 1
        %v415 = vpop.permute.xlu0 %414
        %416 = vrot.lane.b32.xlu0 %v164, 1
        %v417 = vpop.permute.xlu0 %416
        %418 = vrot.lane.b32.xlu0 %v166, 1
        %v419 = vpop.permute.xlu0 %418
        %v420 = vsel %vm216, %v413, %v417
        %v421 = vsel %vm216, %v415, %v419
        %v422 = vsel %vm216, %v417, %v413
        %v423 = vsel %vm216, %v419, %v415
        %v424 = vsub.f32 %v408, %v422
        %v425 = vsub.f32 %v410, %v420
        %v426 = vsub.f32 %v409, %v423
        %v427 = vsub.f32 %v411, %v421
        %v428 = vmul.f32 %v424, 0.5
        %v429 = vmul.f32 %v425, 0.5
        %v430 = vmul.f32 %v426, 0.5
        %v431 = vmul.f32 %v427, 0.5
        %432 = vrot.lane.b32.xlu0 %v428, 127
        %v433 = vpop.permute.xlu0 %432
        %434 = vrot.lane.b32.xlu0 %v430, 127
        %v435 = vpop.permute.xlu0 %434
        %436 = vrot.lane.b32.xlu0 %v429, 127
        %v437 = vpop.permute.xlu0 %436
        %438 = vrot.lane.b32.xlu0 %v431, 127
        %v439 = vpop.permute.xlu0 %438
        %v440 = vsel %vm203, %v433, %v437
        %v441 = vsel %vm203, %v435, %v439
        %v442 = vsel %vm203, %v437, %v433
        %v443 = vsel %vm203, %v439, %v435
        %444 = vrot.lane.b32.xlu0 %v428, 1
        %v445 = vpop.permute.xlu0 %444
        %446 = vrot.lane.b32.xlu0 %v430, 1
        %v447 = vpop.permute.xlu0 %446
        %448 = vrot.lane.b32.xlu0 %v429, 1
        %v449 = vpop.permute.xlu0 %448
        %450 = vrot.lane.b32.xlu0 %v431, 1
        %v451 = vpop.permute.xlu0 %450
        %v452 = vsel %vm216, %v445, %v449
        %v453 = vsel %vm216, %v447, %v451
        %v454 = vsel %vm216, %v449, %v445
        %v455 = vsel %vm216, %v451, %v447
        %v456 = vsel %vm223, %v454, %v428
        %v457 = vsel %vm224, %v452, %v429
        %v458 = vsel %vm223, %v455, %v430
        %v459 = vsel %vm224, %v453, %v431
        %v460 = vsel %vm231, %v440, %v456
        %v461 = vsel %vm232, %v442, %v457
        %v462 = vsel %vm231, %v441, %v458
        %v463 = vsel %vm232, %v443, %v459
        %p464 = scmp.eq.s32.totalorder %s23, 2
        %s465 = scalar_select %p464, 1, 0
        %s466 = scvt.s32.f32 %s465
        %v467 = vstv %s466
        %v468 = vadd.f32 %v460, %v467
        %v469 = vadd.f32 %v461, %v467
        %v470 = vadd.f32 %v462, %v467
        %v471 = vadd.f32 %v463, %v467
        %s472 = scalar_lea.vmem %s152, 64 [#allocation5]
        %473 = vst [vmem:[%s472] sm:$0xff] %v468
        %474 = vst [vmem:[%s472 + $0x8] sm:$0xff] %v469
        %475 = vst [vmem:[%s472 + $0x10] sm:$0xff] %v470
        %476 = vst [vmem:[%s472 + $0x18] sm:$0xff] %v471
        %v477 = vld [vmem:[%s472] sm:$0xff]
        %v478 = vld [vmem:[%s472 + $0x10] sm:$0xff]
        %481 = vrot.lane.b32.xlu0 %v477, 112
        %v482 = vpop.permute.xlu0 %481
        %483 = vrot.lane.b32.xlu0 %v478, 112
        %v484 = vpop.permute.xlu0 %483
        %487 = vst.msk [vmem:[%s472] sm:$0xff] %vm259, %v482
        %488 = vst.msk [vmem:[%s472 + $0x10] sm:$0xff] %vm259, %v484
        %v489 = vld [vmem:[%s472 + $0x8] sm:$0xff]
        %v490 = vld [vmem:[%s472 + $0x18] sm:$0xff]
        %493 = vrot.lane.b32.xlu0 %v489, 16
        %v494 = vpop.permute.xlu0 %493
        %495 = vrot.lane.b32.xlu0 %v490, 16
        %v496 = vpop.permute.xlu0 %495
        %499 = vst.msk [vmem:[%s472 + $0x8] sm:$0xff] %vm272, %v494
        %500 = vst.msk [vmem:[%s472 + $0x18] sm:$0xff] %vm272, %v496
        %s501 = scalar_lea.vmem %s472, 1 [#allocation5]
        %v502 = vld [vmem:[%s501] ss:$8 sm:$0x3]
        %503 = vst.msk [vmem:[%s472] ss:$8 sm:$0x3] %vm280, %v502
        %504 = vst.msk [vmem:[%s472] ss:$8 sm:$0x0] %vm280, %v502
        %s505 = scalar_lea.vmem %s472, 22 [#allocation5]
        %v506 = vld [vmem:[%s505] ss:$8 sm:$0x3]
        %s507 = scalar_lea.vmem %s472, 23 [#allocation5]
        %508 = vst.msk [vmem:[%s507] ss:$8 sm:$0x3] %vm280, %v506
        %509 = vst.msk [vmem:[%s507] ss:$8 sm:$0x0] %vm280, %v506
        %s510 = sand.u32 %s68, 1
        %s511 = scalar_lea.sflag [#allocation4], %s510
        %s512 = sand.u32 %s68, 1
        %s513 = smul.addr %s512, 96
        %s514 = scalar_lea.vmem [#allocation5], %s513
        // Predicated region
        $region29: #{tpu_custom_call.1} parent=23 // pred_check
          %p515 = pneg %p78
        $region30: #{tpu_custom_call.1} parent=23 // pred_check_branch
          %517 = sbr.rel (%p515) target = $region32
        $region31: #{tpu_custom_call.1} parent=23 // pred_region
          %s518 = smul.u32 3, %s23
          %s520 = ssub.s32 1536, 1536
          %521 = vsyncadd %s511, %s520
          %s522 = smul.addr %s518, 4
          %s523 = smul.addr %s22, 36
          %s524 = sadd.s32 %s522, %s523
          %s525 = smul.addr %s524, 128
          %s526 = scalar_lea.hbm %s1, %s525
          %s527 = sshll.u32 %s514, 4
          %s528 = int_to_ptr.vmem [resolvable:$true] %s527
          %533 = dma.vmem_to_hbm [thread:$0]  %s528, 1536, %s526, %s511, 256, 256, 16
        $region32: #{tpu_custom_call.1} parent=23 // pred_fallthru
          _
      $region24: #{tpu_custom_call.1} parent=5 // pred_fallthru
        _
      %p534 = scmp.le.s32.totalorder 2, %s13
      // Predicated region
      $region33: #{tpu_custom_call.1} parent=5 // pred_check
        %p535 = pneg %p534
      $region34: #{tpu_custom_call.1} parent=5 // pred_check_branch
        %537 = sbr.rel (%p535) target = $region36
      $region35: #{tpu_custom_call.1} parent=5 // pred_region
        %s538 = ssub.s32 %s13, 2
        // Predicated region
        $region37: #{tpu_custom_call.1} parent=35 // pred_check
          %p539 = pneg %p84
        $region38: #{tpu_custom_call.1} parent=35 // pred_check_branch
          %541 = sbr.rel (%p539) target = $region40
        $region39: #{tpu_custom_call.1} parent=35 // pred_region
          %s542 = sand.u32 %s69, 1
          %s543 = scalar_lea.sflag [#allocation4], %s542
          %s544 = sand.u32 %s69, 1
          %s545 = smul.addr %s544, 96
          %s546 = scalar_lea.vmem [#allocation5], %s545
          %547 = dma.done %s543, 1536
        $region40: #{tpu_custom_call.1} parent=35 // pred_fallthru
          _
      $region36: #{tpu_custom_call.1} parent=5 // pred_fallthru
        _
    $region6: #{tpu_custom_call.1} parent=1 // loop_footer
      %s17 = sadd.s32 1, %s13
    $region7: #{tpu_custom_call.1} parent=1 // loop_footer_branch
      %12 = sbr.rel target = $region3
    $region8: #{tpu_custom_call.1} parent=1 // loop_exit
      _
    %548 = vsyncpa [#allocation3], 1
    %s549 = scalar_lea.sflag [#allocation3], 1
    %550 = vsyncpa %s549, 1
    %551 = vsyncpa [#allocation4], 1
    %s552 = scalar_lea.sflag [#allocation4], 1
    %553 = vsyncpa %s552, 1

</llo_original>
